<compile_context>
chip_gen: v7x
topology: tpu7x:2x2x1
jax: 0.10.0
libtpu: 0.0.40
codegen_flags: <defaults>
</compile_context>

<pallas_src>
import jax
import jax.numpy as jnp
from jax.experimental import pallas as pl
from jax.experimental.pallas import tpu as pltpu


def _logreg_kernel(x_ref, w_ref, b_ref, o_ref):
    """Linear(D->1) + both sigmoids, all lane-dense in VMEM."""
    x = x_ref[...]                    # (tn, D) f32, VMEM
    w = w_ref[...]                    # (1, D)  f32, VMEM (constant block, DMA'd once)
    b = b_ref[0]                      # scalar bias from SMEM
    # z^T = w @ x^T -> (1, tn), lane-dense.  One small MXU pass per tile; avoids a
    # lane-sparse (tn, 1) column layout for z / sigmoid / the store.
    zt = jax.lax.dot_general(
        w, x, (((1,), (1,)), ((), ())),
        preferred_element_type=jnp.float32) + b
    # Row 0 = sigmoid(-z), row 1 = sigmoid(z): one EUP pass over a (2, tn) tile.
    # sigmoid(-z) is evaluated directly (1 - sigmoid(z) underflows for large z).
    o_ref[...] = jax.nn.sigmoid(jnp.concatenate([-zt, zt], axis=0))


def _round_up(a: int, m: int) -> int:
    return (a + m - 1) // m * m


def _cdiv(a: int, b: int) -> int:
    return (a + b - 1) // b


def _auto_rows_per_step(n: int, d: int) -> int:
    """Row tile: largest multiple of 128 whose buffers fit a ~12 MiB VMEM budget."""
    lane_d = _round_up(max(d, 1), 128)     # x block is lane-padded to 128 in VMEM
    x_bufs = 3                             # pl.Buffered(3) on the x input
    out_sub = 8                            # (2, tn) out block sublane-pads 2 -> 8
    budget = 12 * 1024 * 1024              # safe under v5e's 16 MiB scoped default
    bytes_per_row = 4 * (x_bufs * lane_d + 2 * out_sub)
    tn = max(128, (budget // bytes_per_row) // 128 * 128)
    # v7x runs the "parallel" row axis on 2 TensorCores: prefer >= 8 grid steps.
    if n > 8 * 128:
        tn = min(tn, _round_up(_cdiv(n, 8), 128))
    return tn


def logistic_regression_forward(x, weight, bias, rep=False, rows_per_step=None):
    """JAX wrapper mirroring LogisticRegression.forward(x, rep)."""
    d = x.shape[-1]
    if rep:
        return x.reshape(-1, d)                        # dtype-preserving flatten (torch .view)

    x2 = x.reshape(-1, d).astype(jnp.float32)          # (N, D)
    n = x2.shape[0]
    w2 = weight.reshape(1, d).astype(jnp.float32)      # fc1.weight, (1, D)
    b1 = bias.reshape(1).astype(jnp.float32)           # fc1.bias,   (1,)

    tn = _auto_rows_per_step(n, d) if rows_per_step is None \
        else max(128, _round_up(int(rows_per_step), 128))
    if n <= tn:
        tn = n                       # single block: block dims == full array dims
    grid = _cdiv(n, tn)              # ragged tail handled by masked boundary block

    def x_index(i):
        return (i, 0)

    x_spec = pl.BlockSpec((tn, d), x_index)
    if grid >= 3:
        # Per-step real bytes are small for small D -> deepen the input pipeline.
        try:
            x_spec = pl.BlockSpec((tn, d), x_index, pipeline_mode=pl.Buffered(3))
        except (TypeError, AttributeError):
            x_spec = pl.BlockSpec((tn, d), x_index)    # older jax: default 2-deep

    cost = pl.CostEstimate(
        flops=2 * n * d,                               # Linear(D -> 1)
        transcendentals=2 * n,                         # two sigmoids per row
        bytes_accessed=4 * (n * d + 2 * n + d + 1),    # memory-bound, cheap
    )

    out = pl.pallas_call(
        _logreg_kernel,
        out_shape=jax.ShapeDtypeStruct((2, n), jnp.float32),   # lane-dense output
        grid=(grid,),
        in_specs=[
            x_spec,                                            # x rows: pipelined DMA
            pl.BlockSpec((1, d), lambda i: (0, 0)),            # weight: constant block
            pl.BlockSpec(memory_space=pltpu.SMEM),             # bias: scalar in SMEM
        ],
        out_specs=pl.BlockSpec((2, tn), lambda i: (0, i)),     # lane-dense store
        compiler_params=pltpu.CompilerParams(
            dimension_semantics=("parallel",)),                # rows across both v7x TCs
        cost_estimate=cost,
    )(x2, w2, b1)
    return out.T                                               # (N, 2): [sig(-z), sig(z)]


if __name__ == "__main__":
    key = jax.random.PRNGKey(0)
    kx, kw, kb, kbig = jax.random.split(key, 4)

    B, T, D = 2, 4, 8                                  # small shapes; N = B*T = 8
    x = jax.random.normal(kx, (B, T, D), dtype=jnp.float32)
    weight = 0.1 * jax.random.normal(kw, (1, D), dtype=jnp.float32)   # fc1.weight
    bias = 0.1 * jax.random.normal(kb, (1,), dtype=jnp.float32)       # fc1.bias

    def ref_fwd(xx):
        x2 = xx.reshape(-1, xx.shape[-1]).astype(jnp.float32)
        z = x2 @ weight.reshape(1, -1).T + bias
        return jnp.concatenate([jax.nn.sigmoid(-z), jax.nn.sigmoid(z)], axis=1)

    # Single-block path (N = 8 -> one grid step).
    out = jax.block_until_ready(logistic_regression_forward(x, weight, bias))
    assert out.shape == (B * T, 2)
    assert jnp.allclose(out, ref_fwd(x), atol=2e-3, rtol=2e-3)

    # Multi-step + ragged-tail path: N = 300 rows, 128-row tiles -> 3 grid steps,
    # masked final block (44 valid rows), Buffered(3) input pipeline.
    x_big = jax.random.normal(kbig, (300, D), dtype=jnp.float32)
    out_big = jax.block_until_ready(
        logistic_regression_forward(x_big, weight, bias, rows_per_step=128))
    assert out_big.shape == (300, 2)
    assert jnp.allclose(out_big, ref_fwd(x_big), atol=2e-3, rtol=2e-3)

    # Large-|z| precision: column 0 must be sigmoid(-z) (positive), not 1 - sigmoid(z)
    # (which would be exactly 0).  Exact arithmetic: w = 1, b = 0, x = 4 -> z = 32.
    w_ones = jnp.ones((1, D), dtype=jnp.float32)
    b_zero = jnp.zeros((1,), dtype=jnp.float32)
    x_ext = jnp.full((16, D), 4.0, dtype=jnp.float32)
    out_ext = jax.block_until_ready(
        logistic_regression_forward(x_ext, w_ones, b_zero))
    assert bool(jnp.all(out_ext[:, 0] > 0.0)) and bool(jnp.all(out_ext[:, 0] < 1e-10))
    assert jnp.allclose(out_ext[:, 1], 1.0, atol=1e-5)

    # rep=True path returns the flattened view, dtype-preserving (no kernel).
    rep = logistic_regression_forward(x.astype(jnp.bfloat16), weight, bias, rep=True)
    assert rep.shape == (B * T, D) and rep.dtype == jnp.bfloat16

    print("KERNEL_OK")
</pallas_src>

<mosaic_0001>
module attributes {stable_mosaic.version = 11 : i64} {
  func.func @_logreg_kernel(%arg0: i32, %arg1: memref<8x8xf32, #tpu.memory_space<vmem>>, %arg2: memref<1x8xf32, #tpu.memory_space<vmem>>, %arg3: memref<1xf32, #tpu.memory_space<smem>>, %arg4: memref<2x8xf32, #tpu.memory_space<vmem>>) attributes {dimension_semantics = [#tpu.dimension_semantics<parallel>], iteration_bounds = array<i64: 1>, scalar_prefetch = 0 : i64, scratch_operands = 0 : i64, tpu.core_type = #tpu.core_type<tc>, window_params = [{transform_indices = @transform_0, window_bounds = array<i64: 8, 8>}, {pipeline_mode = #tpu.pipeline_mode<synchronous>, transform_indices = @transform_1, window_bounds = array<i64: 1, 8>}, {transform_indices = @transform_2, window_bounds = array<i64: 1>}, {transform_indices = @transform_3, window_bounds = array<i64: 2, 8>}]} {
    %c0 = arith.constant 0 : index
    %c0_0 = arith.constant 0 : index
    %0 = vector.load %arg1[%c0, %c0_0] : memref<8x8xf32, #tpu.memory_space<vmem>>, vector<8x8xf32>
    %c0_1 = arith.constant 0 : index
    %c0_2 = arith.constant 0 : index
    %1 = vector.load %arg2[%c0_1, %c0_2] : memref<1x8xf32, #tpu.memory_space<vmem>>, vector<1x8xf32>
    %c0_3 = arith.constant 0 : index
    %2 = memref.load %arg3[%c0_3] : memref<1xf32, #tpu.memory_space<smem>>
    %cst = arith.constant dense<0.000000e+00> : vector<1x8xf32>
    %3 = tpu.matmul %1, %0, %cst {dimension_numbers = #tpu.dot_dimension_numbers<[1], [1], [0], [0], [0, 0, 1, 0], [], []>} : vector<1x8xf32>, vector<8x8xf32>, vector<1x8xf32> -> vector<1x8xf32>
    %4 = vector.broadcast %2 : f32 to vector<1x8xf32>
    %5 = arith.addf %3, %4 : vector<1x8xf32>
    %cst_4 = arith.constant 0.000000e+00 : f32
    %6 = vector.broadcast %cst_4 : f32 to vector<1x8xf32>
    %7 = arith.subf %6, %5 : vector<1x8xf32>
    %8 = tpu.concatenate %7, %5 in 0 : vector<1x8xf32>, vector<1x8xf32> -> vector<2x8xf32>
    %9 = arith.negf %8 : vector<2x8xf32>
    %10 = math.exp %9 : vector<2x8xf32>
    %cst_5 = arith.constant 1.000000e+00 : f32
    %11 = vector.broadcast %cst_5 : f32 to vector<2x8xf32>
    %12 = arith.addf %11, %10 : vector<2x8xf32>
    %13 = arith.divf %11, %12 : vector<2x8xf32>
    %c0_6 = arith.constant 0 : index
    %c0_7 = arith.constant 0 : index
    %14 = vector.load %arg4[%c0_6, %c0_7] : memref<2x8xf32, #tpu.memory_space<vmem>>, vector<2x8xf32>
    tpu.vector_store %arg4[%c0_6, %c0_7], %13 {strides = array<i32>} : memref<2x8xf32, #tpu.memory_space<vmem>>, vector<2x8xf32>,
    return
  }
  func.func @transform_0(%arg0: i32) -> (i32, i32) {
    %c0_i32 = arith.constant 0 : i32
    %c0_i32_0 = arith.constant 0 : i32
    return %arg0, %c0_i32 : i32, i32
  }
  func.func @transform_1(%arg0: i32) -> (i32, i32) {
    %c0_i32 = arith.constant 0 : i32
    %c0_i32_0 = arith.constant 0 : i32
    %c0_i32_1 = arith.constant 0 : i32
    return %c0_i32, %c0_i32_0 : i32, i32
  }
  func.func @transform_2(%arg0: i32) -> i32 {
    %c0_i32 = arith.constant 0 : i32
    %c0_i32_0 = arith.constant 0 : i32
    return %c0_i32 : i32
  }
  func.func @transform_3(%arg0: i32) -> (i32, i32) {
    %c0_i32 = arith.constant 0 : i32
    %c0_i32_0 = arith.constant 0 : i32
    return %c0_i32, %arg0 : i32, i32
  }
}

</mosaic_0001>

<llo_original>
// kernel: tpu_custom_call.1
$region0: #{tpu_custom_call.1}
  #allocation0 [shape = 'u32[]', space=smem, size = 0x4, offset = 0x4, fixed_abs, tag = 'smem constant byte address 0x4 - core index']
  #allocation1 [shape = 'u32[144,128]{1,0:T(1,128)}', space=vmem, size = 0x12000, scoped, tag = 'internal scratch']
  #allocation2 [shape = 'f32[1]{0:T(128)S(6)}', space=smem, size = 0x200, scoped, tag = 'scoped memory for tpu_custom_call.1']
  %s0 = inlined_call_operand.hbm [shape: f32[8,8], index: 0, kind: input, shape index: {}]
  %s1 = inlined_call_operand.vmem [shape: f32[1,8], index: 1, kind: input, shape index: {}]
  %s2 = inlined_call_operand.<no memory space> [shape: f32[1], index: 2, kind: input, shape index: {}]
  %s3 = inlined_call_operand.hbm [shape: f32[2,8], index: 3, kind: output, shape index: {}]
  %s4 = sld [smem:[#allocation0]]
  $region26: #{tpu_custom_call.1} parent=0
    _
  %s6 = ssub.s32 1, %s4
  %s7 = scalar_select 0, %s6, %s4
  %8 = sst [smem:[#allocation2]] %s2
  $region1: #{tpu_custom_call.1} parent=0
    #allocation3 [shape = 'u8[4096]{0}', space=vmem, size = 0x1000, scoped, tag = 'input window, operand 0, single buffered']
    #allocation4 [shape = 's32[1]{0}', space=sflag, size = 0x4, scoped, tag = 'scoped memory for tpu_custom_call.1']
    #allocation5 [shape = 's32[1]{0}', space=sflag, size = 0x4, scoped, tag = 'scoped memory for tpu_custom_call.1']
    #allocation6 [shape = 'u8[1024]{0}', space=vmem, size = 0x400, scoped, tag = 'output window, operand 0, single buffered']
    %9 = vsyncpa [#allocation4], 0
    %10 = vsyncpa [#allocation5], 0
    // Predicated region
    $region2: #{tpu_custom_call.1} parent=1 // pred_check
      _
    $region3: #{tpu_custom_call.1} parent=1 // pred_check_branch
      %12 = sbr.rel (0) target = $region5
    $region4: #{tpu_custom_call.1} parent=1 // pred_region
      %s14 = ssub.s32 128, 128
      %15 = vsyncadd [#allocation4], %s14
      %s17 = sshll.u32 [#allocation3], 4
      %s18 = int_to_ptr.vmem [resolvable:$true] %s17
      %20 = dma.hbm_to_vmem [thread:$0]  %s0, 128, %s18, [#allocation4]
    $region5: #{tpu_custom_call.1} parent=1 // pred_fallthru
      _
    // Predicated region
    $region6: #{tpu_custom_call.1} parent=1 // pred_check
      _
    $region7: #{tpu_custom_call.1} parent=1 // pred_check_branch
      %22 = sbr.rel (0) target = $region9
    $region8: #{tpu_custom_call.1} parent=1 // pred_region
      _
    $region9: #{tpu_custom_call.1} parent=1 // pred_fallthru
      _
    // Predicated region
    $region10: #{tpu_custom_call.1} parent=1 // pred_check
      _
    $region11: #{tpu_custom_call.1} parent=1 // pred_check_branch
      %24 = sbr.rel (0) target = $region13
    $region12: #{tpu_custom_call.1} parent=1 // pred_region
      _
    $region13: #{tpu_custom_call.1} parent=1 // pred_fallthru
      _
    // Predicated region
    $region14: #{tpu_custom_call.1} parent=1 // pred_check
      _
    $region15: #{tpu_custom_call.1} parent=1 // pred_check_branch
      %26 = sbr.rel (0) target = $region17
    $region16: #{tpu_custom_call.1} parent=1 // pred_region
      %27 = dma.done [#allocation4], 128
    $region17: #{tpu_custom_call.1} parent=1 // pred_fallthru
      _
    %v28 = vld [vmem:[#allocation3] sm:$0xff]
    %v29 = vld [vmem:[%s1] sm:$0x1]
    %s30 = sld [smem:[#allocation2]]
    %v31 = vstv %s30
    %vm32 = vcmask 64512
    %v34 = vsel %vm32, %v29, 0
    %v37 = vsel %vm32, %v28, 0
    %39 = vmatprep.subr.mxu0 0.0
    %40 = vmatpush1.xpose.msra.mxu0 %v37
    %41 = vmatprep.subr.mxu0 0.0
    %42 = vmatpush1.xpose.msra.mxu0 0.0
    %43 = vmatprep.subr.mxu0 0.0
    %44 = vmatpush1.xpose.msra.mxu0 0.0
    %45 = vmatprep.subr.mxu0 0.0
    %46 = vmatpush1.xpose.msra.mxu0 0.0
    %47 = vmatprep.subr.mxu0 0.0
    %48 = vmatpush1.xpose.msra.mxu0 0.0
    %49 = vmatprep.subr.mxu0 0.0
    %50 = vmatpush1.xpose.msra.mxu0 0.0
    %51 = vmatprep.subr.mxu0 0.0
    %52 = vmatpush1.xpose.msra.mxu0 0.0
    %53 = vmatprep.subr.mxu0 0.0
    %54 = vmatpush1.xpose.msra.mxu0 0.0
    %55 = vmatprep.subr.mxu0 0.0
    %56 = vmatpush1.xpose.msra.mxu0 0.0
    %57 = vmatprep.subr.mxu0 0.0
    %58 = vmatpush1.xpose.msra.mxu0 0.0
    %59 = vmatprep.subr.mxu0 0.0
    %60 = vmatpush1.xpose.msra.mxu0 0.0
    %61 = vmatprep.subr.mxu0 0.0
    %62 = vmatpush1.xpose.msra.mxu0 0.0
    %63 = vmatprep.subr.mxu0 0.0
    %64 = vmatpush1.xpose.msra.mxu0 0.0
    %65 = vmatprep.subr.mxu0 0.0
    %66 = vmatpush1.xpose.msra.mxu0 0.0
    %67 = vmatprep.subr.mxu0 0.0
    %68 = vmatpush1.xpose.msra.mxu0 0.0
    %69 = vmatprep.subr.mxu0 0.0
    %70 = vmatpush1.xpose.msra.mxu0 0.0
    %71 = vmatprep.subr.mxu0 0.0
    %72 = vmatpush1.xpose.msra.mxu0 0.0
    %73 = vmatprep.subr.mxu0 0.0
    %74 = vmatpush1.xpose.msra.mxu0 0.0
    %75 = vmatprep.subr.mxu0 0.0
    %76 = vmatpush1.xpose.msra.mxu0 0.0
    %77 = vmatprep.subr.mxu0 0.0
    %78 = vmatpush1.xpose.msra.mxu0 0.0
    %79 = vmatprep.subr.mxu0 0.0
    %80 = vmatpush1.xpose.msra.mxu0 0.0
    %81 = vmatprep.subr.mxu0 0.0
    %82 = vmatpush1.xpose.msra.mxu0 0.0
    %83 = vmatprep.subr.mxu0 0.0
    %84 = vmatpush1.xpose.msra.mxu0 0.0
    %85 = vmatprep.subr.mxu0 0.0
    %86 = vmatpush1.xpose.msra.mxu0 0.0
    %87 = vmatprep.subr.mxu0 0.0
    %88 = vmatpush1.xpose.msra.mxu0 0.0
    %89 = vmatprep.subr.mxu0 0.0
    %90 = vmatpush1.xpose.msra.mxu0 0.0
    %91 = vmatprep.subr.mxu0 0.0
    %92 = vmatpush1.xpose.msra.mxu0 0.0
    %93 = vmatprep.subr.mxu0 0.0
    %94 = vmatpush1.xpose.msra.mxu0 0.0
    %95 = vmatprep.subr.mxu0 0.0
    %96 = vmatpush1.xpose.msra.mxu0 0.0
    %97 = vmatprep.subr.mxu0 0.0
    %98 = vmatpush1.xpose.msra.mxu0 0.0
    %99 = vmatprep.subr.mxu0 0.0
    %100 = vmatpush1.xpose.msra.mxu0 0.0
    %101 = vmatprep.subr.mxu0 0.0
    %102 = vmatpush1.xpose.msra.mxu0 0.0
    %103 = vmatprep.mubr.f32.mxu0 0.0
    %104 = vmatmul.mubr.f32.gmra.mrb[0].mxu0 %v34
    %v105 = vpop.f32.mrb[0].mxu0
    %v106 = vadd.f32 %v31, %v105
    %v107 = vpop.f32.mrb[0].mxu0
    %108 = vdwg.mxu0
    %v109 = vsub.f32 0.0, %v106
    %v111 = vrot.slane %v106, 7
    %vm113 = vcmask 1040384
    %v114 = vsel %vm113, %v109, %v111
    %v115 = vxor.u32 %v114, 2147483648
    %v116 = vmul.f32 %v115, 1.442695
    %v117 = vpow.pop %v116
    %v118 = vadd.f32 %v117, 1.0
    %v119 = vrcp.pop %v118
    %v120 = vmul.f32 1.0, %v119
    %vm121 = vcmask 58368
    %122 = vst.msk [vmem:[#allocation6] sm:$0x3] %vm121, %v120
    // Predicated region
    $region18: #{tpu_custom_call.1} parent=1 // pred_check
      _
    $region19: #{tpu_custom_call.1} parent=1 // pred_check_branch
      %124 = sbr.rel (0) target = $region21
    $region20: #{tpu_custom_call.1} parent=1 // pred_region
      %s126 = ssub.s32 32, 32
      %127 = vsyncadd [#allocation5], %s126
      %s129 = sshll.u32 [#allocation6], 4
      %s130 = int_to_ptr.vmem [resolvable:$true] %s129
      %132 = dma.vmem_to_hbm [thread:$0]  %s130, 32, %s3, [#allocation5]
    $region21: #{tpu_custom_call.1} parent=1 // pred_fallthru
      _
    // Predicated region
    $region22: #{tpu_custom_call.1} parent=1 // pred_check
      _
    $region23: #{tpu_custom_call.1} parent=1 // pred_check_branch
      %134 = sbr.rel (0) target = $region25
    $region24: #{tpu_custom_call.1} parent=1 // pred_region
      %135 = dma.done [#allocation5], 32
    $region25: #{tpu_custom_call.1} parent=1 // pred_fallthru
      _
    %136 = vsyncpa [#allocation4], 1
    %137 = vsyncpa [#allocation5], 1

</llo_original>
